<compile_context>
chip_gen: v7x
topology: tpu7x:2x2x1
jax: 0.10.0
libtpu: 0.0.40
codegen_flags: <defaults>
</compile_context>

<pallas_src>
import jax
import jax.numpy as jnp
from jax.experimental import pallas as pl
from jax.experimental.pallas import tpu as pltpu

F_DIM = 32
_EPS = 1e-5


def _occnet_decoder_kernel(s_ref, w1_ref, b1_ref, wr1_ref, br1_ref,
                           w2_ref, v_ref, c_ref, out_ref):
    # s_ref   : (1, 8, TN)  zero-padded sample coords (x, y, z, 0, ..., 0)
    # w1_ref  : (1, F, 8)   fc1 weight with bn1 (gamma*inv) folded, zero-padded cols
    # b1_ref  : (1, F, 1)   fc1 bias with bn1 fully folded
    # wr1_ref : (1, F, F)   resnet.fc1 weight with bn2 folded
    # br1_ref : (1, F, 1)   resnet.fc1 bias with bn2 folded
    # w2_ref  : (1, 1, F)   (final CBN scale * fc2 weight) row, hits the residual input
    # v_ref   : (1, 1, F)   w2_eff @ resnet.fc2 weight
    # c_ref   : (1, 1, 1)   all remaining constant bias terms
    # out_ref : (1, 1, TN)
    s = s_ref[0]                                                       # (8, TN)
    x1 = jnp.dot(w1_ref[0], s,
                 preferred_element_type=jnp.float32) + b1_ref[0]       # (F, TN)
    h2 = jnp.dot(wr1_ref[0], jnp.maximum(x1, 0.0),
                 preferred_element_type=jnp.float32) + br1_ref[0]      # (F, TN)
    out_ref[0] = (jnp.dot(w2_ref[0], x1, preferred_element_type=jnp.float32)
                  + jnp.dot(v_ref[0], jnp.maximum(h2, 0.0),
                            preferred_element_type=jnp.float32)
                  + c_ref[0])                                          # (1, TN)


def _device_kind():
    try:
        return jax.devices()[0].device_kind.lower()
    except Exception:  # pragma: no cover - defensive
        return ""


def _choose_tiling(n, batch, max_tn):
    """Lane-aligned tile size and padded N (cdiv grid; >=2 parallel steps if possible)."""
    n128 = -(-n // 128) * 128
    num_tiles = max(1, -(-n128 // max_tn))
    if batch * num_tiles < 2 and n128 >= 256:
        num_tiles = 2                       # keep both v7x TensorCores busy
    tn = -(-(-(-n128 // num_tiles)) // 128) * 128   # roundup(ceil(n128/num_tiles), 128)
    return tn, num_tiles * tn


@jax.jit
def occnet_decoder(embedding, samples, params):
    B, N, _ = samples.shape
    f = embedding.shape[-1]

    # ---------- per-batch algebraic folding (plain JAX, O(B*F^2)) ----------
    def cbn(name):
        beta = embedding @ params[name + "_beta_w"].T + params[name + "_beta_b"]
        gamma = embedding @ params[name + "_gamma_w"].T + params[name + "_gamma_b"]
        inv = 1.0 / jnp.sqrt(params[name + "_var"] + _EPS)
        return beta, gamma * inv, params[name + "_mean"]     # (B,F), (B,F), (1,)

    beta1, g1, m1 = cbn("bn1")
    beta2, g2, m2 = cbn("bn2")
    beta_f, gf, mf = cbn("bn")

    w1, b1 = params["fc1_w"], params["fc1_b"]                 # (F,3), (F,)
    wr1, br1 = params["res_fc1_w"], params["res_fc1_b"]       # (F,F), (F,)
    wr2, br2 = params["res_fc2_w"], params["res_fc2_b"]       # (F,F), (F,)
    w2, b2 = params["fc2_w"][0], params["fc2_b"]              # (F,),  (1,)

    # bn1 folded into fc1:  x1 = (g1 . W1) s + (g1*(b1 - m1) + beta1)
    w1_eff = jnp.pad(g1[:, :, None] * w1[None], ((0, 0), (0, 0), (0, 5)))  # (B,F,8)
    b1_eff = (g1 * (b1 - m1) + beta1)[:, :, None]                          # (B,F,1)
    # bn2 folded into resnet.fc1
    wr1_eff = g2[:, :, None] * wr1[None]                                   # (B,F,F)
    br1_eff = (g2 * (br1 - m2) + beta2)[:, :, None]                        # (B,F,1)
    # final CBN + fc2 distributed through the residual:
    #   out = w2_eff . x1 + (w2_eff @ Wr2) . relu(h2) + const
    w2_eff = gf * w2                                                        # (B,F)
    v_row = w2_eff @ wr2                                                    # (B,F)
    const = (w2_eff @ br2 + (beta_f - gf * mf) @ w2 + b2)[:, None, None]    # (B,1,1)

    # ---------- layout plumbing: sample axis -> lanes, pad to tile grid ----------
    max_tn = 8192 if "v7" in _device_kind() else 16384
    tn, n_pad = _choose_tiling(N, B, max_tn)
    # TODO(synk): if the producer can emit samples as (B, 3, N) this standalone
    # HBM transpose disappears; the module interface gives (B, N, 3).
    s_t = jnp.transpose(samples, (0, 2, 1))                                 # (B,3,N)
    s_pad = jnp.pad(s_t, ((0, 0), (0, 5), (0, n_pad - N)))                  # (B,8,n_pad)

    grid = (B, n_pad // tn)
    out = pl.pallas_call(
        _occnet_decoder_kernel,
        out_shape=jax.ShapeDtypeStruct((B, 1, n_pad), jnp.float32),
        grid=grid,
        in_specs=[
            pl.BlockSpec((1, 8, tn), lambda b, j: (b, 0, j)),   # samples (lanes)
            pl.BlockSpec((1, f, 8), lambda b, j: (b, 0, 0)),    # folded fc1 weight
            pl.BlockSpec((1, f, 1), lambda b, j: (b, 0, 0)),    # folded fc1 bias
            pl.BlockSpec((1, f, f), lambda b, j: (b, 0, 0)),    # folded resnet.fc1 W
            pl.BlockSpec((1, f, 1), lambda b, j: (b, 0, 0)),    # folded resnet.fc1 b
            pl.BlockSpec((1, 1, f), lambda b, j: (b, 0, 0)),    # w2_eff row
            pl.BlockSpec((1, 1, f), lambda b, j: (b, 0, 0)),    # v = w2_eff @ Wr2
            pl.BlockSpec((1, 1, 1), lambda b, j: (b, 0, 0)),    # constant bias
        ],
        out_specs=pl.BlockSpec((1, 1, tn), lambda b, j: (b, 0, j)),
        compiler_params=pltpu.CompilerParams(
            dimension_semantics=("parallel", "parallel"),
            vmem_limit_bytes=32 * 1024 * 1024),
    )(s_pad, w1_eff, b1_eff, wr1_eff, br1_eff,
      w2_eff[:, None, :], v_row[:, None, :], const)

    # lane-dense (B, 1, n_pad) -> module's (B, N, 1)
    return out[:, 0, :N][:, :, None]


# ---------------- pure-JAX reference (mirrors the PyTorch module) ----------------
def _linear(x, w, b):
    return x @ w.T + b


def _cbn_ref(emb, x, p, name):
    beta = _linear(emb, p[name + "_beta_w"], p[name + "_beta_b"])
    gamma = _linear(emb, p[name + "_gamma_w"], p[name + "_gamma_b"])
    xn = (x - p[name + "_mean"]) / jnp.sqrt(p[name + "_var"] + _EPS)
    return gamma[:, None, :] * xn + beta[:, None, :]


def _ref_forward(embedding, samples, p):
    x = _linear(samples, p["fc1_w"], p["fc1_b"])                 # (B,N,F)
    x = _cbn_ref(embedding, x, p, "bn1")
    init = x
    h = _linear(jnp.maximum(x, 0.0), p["res_fc1_w"], p["res_fc1_b"])
    h = _cbn_ref(embedding, h, p, "bn2")
    h = _linear(jnp.maximum(h, 0.0), p["res_fc2_w"], p["res_fc2_b"])
    x = init + h
    x = _cbn_ref(embedding, x, p, "bn")
    return _linear(x, p["fc2_w"], p["fc2_b"])                    # (B,N,1)


def _init_params(key, f=F_DIM):
    names_shapes = [
        ("fc1_w", (f, 3)), ("fc1_b", (f,)),
        ("bn1_beta_w", (f, f)), ("bn1_beta_b", (f,)),
        ("bn1_gamma_w", (f, f)), ("bn1_gamma_b", (f,)),
        ("res_fc1_w", (f, f)), ("res_fc1_b", (f,)),
        ("bn2_beta_w", (f, f)), ("bn2_beta_b", (f,)),
        ("bn2_gamma_w", (f, f)), ("bn2_gamma_b", (f,)),
        ("res_fc2_w", (f, f)), ("res_fc2_b", (f,)),
        ("bn_beta_w", (f, f)), ("bn_beta_b", (f,)),
        ("bn_gamma_w", (f, f)), ("bn_gamma_b", (f,)),
        ("fc2_w", (1, f)), ("fc2_b", (1,)),
    ]
    keys = jax.random.split(key, len(names_shapes) + 6)
    p = {n: 0.1 * jax.random.normal(k, s, jnp.float32)
         for (n, s), k in zip(names_shapes, keys)}
    # non-trivial running-stat buffers (PyTorch buffers are shape-(1,) scalars)
    for i, name in enumerate(("bn1", "bn2", "bn")):
        k_m = keys[len(names_shapes) + 2 * i]
        k_v = keys[len(names_shapes) + 2 * i + 1]
        p[name + "_mean"] = 0.05 * jax.random.normal(k_m, (1,), jnp.float32)
        p[name + "_var"] = 1.0 + 0.1 * jnp.abs(jax.random.normal(k_v, (1,), jnp.float32))
    return p


if __name__ == "__main__":
    key = jax.random.PRNGKey(0)
    k_emb, k_smp, k_par = jax.random.split(key, 3)

    B, N, f = 2, 200, F_DIM          # N not a multiple of 128: exercises pad + slice
    embedding = jax.random.normal(k_emb, (B, f), jnp.float32)
    samples = jax.random.normal(k_smp, (B, N, 3), jnp.float32)
    params = _init_params(k_par, f)

    out = jax.block_until_ready(occnet_decoder(embedding, samples, params))
    ref = _ref_forward(embedding, samples, params)

    if out.shape != (B, N, 1):
        raise AssertionError(f"bad output shape {out.shape}")
    if not jnp.allclose(out, ref, atol=1e-3, rtol=1e-3):
        err = float(jnp.max(jnp.abs(out - ref)))
        raise AssertionError(f"Pallas kernel does not match reference (max err {err})")

    print("KERNEL_OK")
</pallas_src>

<mosaic_0001>
module attributes {stable_mosaic.version = 11 : i64} {
  func.func @_occnet_decoder_kernel(%arg0: i32, %arg1: i32, %arg2: memref<1x8x256xf32, #tpu.memory_space<vmem>>, %arg3: memref<1x32x8xf32, #tpu.memory_space<vmem>>, %arg4: memref<1x32x1xf32, #tpu.memory_space<vmem>>, %arg5: memref<1x32x32xf32, #tpu.memory_space<vmem>>, %arg6: memref<1x32x1xf32, #tpu.memory_space<vmem>>, %arg7: memref<1x1x32xf32, #tpu.memory_space<vmem>>, %arg8: memref<1x1x32xf32, #tpu.memory_space<vmem>>, %arg9: memref<1x1x1xf32, #tpu.memory_space<vmem>>, %arg10: memref<1x1x256xf32, #tpu.memory_space<vmem>>) attributes {dimension_semantics = [#tpu.dimension_semantics<parallel>, #tpu.dimension_semantics<parallel>], iteration_bounds = array<i64: 2, 1>, scalar_prefetch = 0 : i64, scratch_operands = 0 : i64, tpu.core_type = #tpu.core_type<tc>, window_params = [{transform_indices = @transform_0, window_bounds = array<i64: 1, 8, 256>}, {transform_indices = @transform_1, window_bounds = array<i64: 1, 32, 8>}, {transform_indices = @transform_2, window_bounds = array<i64: 1, 32, 1>}, {transform_indices = @transform_3, window_bounds = array<i64: 1, 32, 32>}, {transform_indices = @transform_4, window_bounds = array<i64: 1, 32, 1>}, {transform_indices = @transform_5, window_bounds = array<i64: 1, 1, 32>}, {transform_indices = @transform_6, window_bounds = array<i64: 1, 1, 32>}, {transform_indices = @transform_7, window_bounds = array<i64: 1, 1, 1>}, {transform_indices = @transform_8, window_bounds = array<i64: 1, 1, 256>}]} {
    %c0 = arith.constant 0 : index
    %c0_0 = arith.constant 0 : index
    %c0_1 = arith.constant 0 : index
    %0 = vector.load %arg2[%c0, %c0_0, %c0_1] : memref<1x8x256xf32, #tpu.memory_space<vmem>>, vector<1x8x256xf32>
    %1 = vector.shape_cast %0 : vector<1x8x256xf32> to vector<8x256xf32>
    %c0_2 = arith.constant 0 : index
    %c0_3 = arith.constant 0 : index
    %c0_4 = arith.constant 0 : index
    %2 = vector.load %arg3[%c0_2, %c0_3, %c0_4] : memref<1x32x8xf32, #tpu.memory_space<vmem>>, vector<1x32x8xf32>
    %3 = vector.shape_cast %2 : vector<1x32x8xf32> to vector<32x8xf32>
    %cst = arith.constant dense<0.000000e+00> : vector<32x256xf32>
    %4 = tpu.matmul %3, %1, %cst {dimension_numbers = #tpu.dot_dimension_numbers<[1], [0], [0], [1], [0, 0, 1, 1], [], []>} : vector<32x8xf32>, vector<8x256xf32>, vector<32x256xf32> -> vector<32x256xf32>
    %c0_5 = arith.constant 0 : index
    %c0_6 = arith.constant 0 : index
    %c0_7 = arith.constant 0 : index
    %5 = vector.load %arg4[%c0_5, %c0_6, %c0_7] : memref<1x32x1xf32, #tpu.memory_space<vmem>>, vector<1x32x1xf32>
    %6 = vector.shape_cast %5 : vector<1x32x1xf32> to vector<32x1xf32>
    %7 = vector.broadcast %6 : vector<32x1xf32> to vector<32x256xf32>
    %8 = arith.addf %4, %7 : vector<32x256xf32>
    %c0_8 = arith.constant 0 : index
    %c0_9 = arith.constant 0 : index
    %c0_10 = arith.constant 0 : index
    %9 = vector.load %arg5[%c0_8, %c0_9, %c0_10] : memref<1x32x32xf32, #tpu.memory_space<vmem>>, vector<1x32x32xf32>
    %10 = vector.shape_cast %9 : vector<1x32x32xf32> to vector<32x32xf32>
    %cst_11 = arith.constant 0.000000e+00 : f32
    %11 = vector.broadcast %cst_11 : f32 to vector<32x256xf32>
    %12 = arith.maximumf %8, %11 : vector<32x256xf32>
    %cst_12 = arith.constant dense<0.000000e+00> : vector<32x256xf32>
    %13 = tpu.matmul %10, %12, %cst_12 {dimension_numbers = #tpu.dot_dimension_numbers<[1], [0], [0], [1], [0, 0, 1, 1], [], []>} : vector<32x32xf32>, vector<32x256xf32>, vector<32x256xf32> -> vector<32x256xf32>
    %c0_13 = arith.constant 0 : index
    %c0_14 = arith.constant 0 : index
    %c0_15 = arith.constant 0 : index
    %14 = vector.load %arg6[%c0_13, %c0_14, %c0_15] : memref<1x32x1xf32, #tpu.memory_space<vmem>>, vector<1x32x1xf32>
    %15 = vector.shape_cast %14 : vector<1x32x1xf32> to vector<32x1xf32>
    %16 = vector.broadcast %15 : vector<32x1xf32> to vector<32x256xf32>
    %17 = arith.addf %13, %16 : vector<32x256xf32>
    %c0_16 = arith.constant 0 : index
    %c0_17 = arith.constant 0 : index
    %c0_18 = arith.constant 0 : index
    %18 = vector.load %arg7[%c0_16, %c0_17, %c0_18] : memref<1x1x32xf32, #tpu.memory_space<vmem>>, vector<1x1x32xf32>
    %19 = vector.shape_cast %18 : vector<1x1x32xf32> to vector<1x32xf32>
    %cst_19 = arith.constant dense<0.000000e+00> : vector<1x256xf32>
    %20 = tpu.matmul %19, %8, %cst_19 {dimension_numbers = #tpu.dot_dimension_numbers<[1], [0], [0], [1], [0, 0, 1, 1], [], []>} : vector<1x32xf32>, vector<32x256xf32>, vector<1x256xf32> -> vector<1x256xf32>
    %c0_20 = arith.constant 0 : index
    %c0_21 = arith.constant 0 : index
    %c0_22 = arith.constant 0 : index
    %21 = vector.load %arg8[%c0_20, %c0_21, %c0_22] : memref<1x1x32xf32, #tpu.memory_space<vmem>>, vector<1x1x32xf32>
    %22 = vector.shape_cast %21 : vector<1x1x32xf32> to vector<1x32xf32>
    %cst_23 = arith.constant 0.000000e+00 : f32
    %23 = vector.broadcast %cst_23 : f32 to vector<32x256xf32>
    %24 = arith.maximumf %17, %23 : vector<32x256xf32>
    %cst_24 = arith.constant dense<0.000000e+00> : vector<1x256xf32>
    %25 = tpu.matmul %22, %24, %cst_24 {dimension_numbers = #tpu.dot_dimension_numbers<[1], [0], [0], [1], [0, 0, 1, 1], [], []>} : vector<1x32xf32>, vector<32x256xf32>, vector<1x256xf32> -> vector<1x256xf32>
    %26 = arith.addf %20, %25 : vector<1x256xf32>
    %c0_25 = arith.constant 0 : index
    %c0_26 = arith.constant 0 : index
    %c0_27 = arith.constant 0 : index
    %27 = vector.load %arg9[%c0_25, %c0_26, %c0_27] : memref<1x1x1xf32, #tpu.memory_space<vmem>>, vector<1x1x1xf32>
    %28 = vector.shape_cast %27 : vector<1x1x1xf32> to vector<1x1xf32>
    %29 = vector.broadcast %28 : vector<1x1xf32> to vector<1x256xf32>
    %30 = arith.addf %26, %29 : vector<1x256xf32>
    %c0_28 = arith.constant 0 : index
    %c0_29 = arith.constant 0 : index
    %c0_30 = arith.constant 0 : index
    %31 = vector.load %arg10[%c0_28, %c0_29, %c0_30] : memref<1x1x256xf32, #tpu.memory_space<vmem>>, vector<1x1x256xf32>
    %32 = vector.shape_cast %31 : vector<1x1x256xf32> to vector<1x256xf32>
    %33 = vector.shape_cast %30 : vector<1x256xf32> to vector<1x1x256xf32>
    tpu.vector_store %arg10[%c0_28, %c0_29, %c0_30], %33 {strides = array<i32>} : memref<1x1x256xf32, #tpu.memory_space<vmem>>, vector<1x1x256xf32>,
    return
  }
  func.func @transform_0(%arg0: i32, %arg1: i32) -> (i32, i32, i32) {
    %c0_i32 = arith.constant 0 : i32
    %c0_i32_0 = arith.constant 0 : i32
    return %arg0, %c0_i32, %arg1 : i32, i32, i32
  }
  func.func @transform_1(%arg0: i32, %arg1: i32) -> (i32, i32, i32) {
    %c0_i32 = arith.constant 0 : i32
    %c0_i32_0 = arith.constant 0 : i32
    %c0_i32_1 = arith.constant 0 : i32
    return %arg0, %c0_i32, %c0_i32_0 : i32, i32, i32
  }
  func.func @transform_2(%arg0: i32, %arg1: i32) -> (i32, i32, i32) {
    %c0_i32 = arith.constant 0 : i32
    %c0_i32_0 = arith.constant 0 : i32
    %c0_i32_1 = arith.constant 0 : i32
    return %arg0, %c0_i32, %c0_i32_0 : i32, i32, i32
  }
  func.func @transform_3(%arg0: i32, %arg1: i32) -> (i32, i32, i32) {
    %c0_i32 = arith.constant 0 : i32
    %c0_i32_0 = arith.constant 0 : i32
    %c0_i32_1 = arith.constant 0 : i32
    return %arg0, %c0_i32, %c0_i32_0 : i32, i32, i32
  }
  func.func @transform_4(%arg0: i32, %arg1: i32) -> (i32, i32, i32) {
    %c0_i32 = arith.constant 0 : i32
    %c0_i32_0 = arith.constant 0 : i32
    %c0_i32_1 = arith.constant 0 : i32
    return %arg0, %c0_i32, %c0_i32_0 : i32, i32, i32
  }
  func.func @transform_5(%arg0: i32, %arg1: i32) -> (i32, i32, i32) {
    %c0_i32 = arith.constant 0 : i32
    %c0_i32_0 = arith.constant 0 : i32
    %c0_i32_1 = arith.constant 0 : i32
    return %arg0, %c0_i32, %c0_i32_0 : i32, i32, i32
  }
  func.func @transform_6(%arg0: i32, %arg1: i32) -> (i32, i32, i32) {
    %c0_i32 = arith.constant 0 : i32
    %c0_i32_0 = arith.constant 0 : i32
    %c0_i32_1 = arith.constant 0 : i32
    return %arg0, %c0_i32, %c0_i32_0 : i32, i32, i32
  }
  func.func @transform_7(%arg0: i32, %arg1: i32) -> (i32, i32, i32) {
    %c0_i32 = arith.constant 0 : i32
    %c0_i32_0 = arith.constant 0 : i32
    %c0_i32_1 = arith.constant 0 : i32
    return %arg0, %c0_i32, %c0_i32_0 : i32, i32, i32
  }
  func.func @transform_8(%arg0: i32, %arg1: i32) -> (i32, i32, i32) {
    %c0_i32 = arith.constant 0 : i32
    %c0_i32_0 = arith.constant 0 : i32
    return %arg0, %c0_i32, %arg1 : i32, i32, i32
  }
}

</mosaic_0001>

<llo_original>
// kernel: occnet_decoder.1
$region0: #{occnet_decoder.1}
  #allocation0 [shape = 'u32[]', space=smem, size = 0x4, offset = 0x4, fixed_abs, tag = 'smem constant byte address 0x4 - core index']
  #allocation1 [shape = 'u32[144,128]{1,0:T(1,128)}', space=vmem, size = 0x12000, scoped, tag = 'internal scratch']
  %s0 = inlined_call_operand.vmem [shape: f32[2,8,256], index: 0, kind: input, shape index: {}]
  %s1 = inlined_call_operand.vmem [shape: f32[2,32,8], index: 1, kind: input, shape index: {}]
  %s2 = inlined_call_operand.vmem [shape: f32[2,32,1], index: 2, kind: input, shape index: {}]
  %s3 = inlined_call_operand.vmem [shape: f32[2,32,32], index: 3, kind: input, shape index: {}]
  %s4 = inlined_call_operand.vmem [shape: f32[2,32,1], index: 4, kind: input, shape index: {}]
  %s5 = inlined_call_operand.vmem [shape: f32[2,1,32], index: 5, kind: input, shape index: {}]
  %s6 = inlined_call_operand.vmem [shape: f32[2,1,32], index: 6, kind: input, shape index: {}]
  %s7 = inlined_call_operand.vmem [shape: f32[2,1,1], index: 7, kind: input, shape index: {}]
  %s8 = inlined_call_operand.vmem [shape: f32[2,1,256], index: 8, kind: output, shape index: {}]
  %s9 = sld [smem:[#allocation0]]
  $region65: #{occnet_decoder.1} parent=0
    _
  %s11 = ssub.s32 1, %s9
  %s12 = scalar_select 0, %s11, %s9
  loop: start=0, step=1, limit=4
  $region2: #{occnet_decoder.1} parent=0 // loop_pre_header
    _
  $region3: #{occnet_decoder.1} parent=0 // loop_header
    %s14 = sphi 0, %s18
    %p15 = scmp.ge.s32.totalorder %s14, 4
    %s21 = sphi 0, %s33
    %s22 = sphi 0, %s29
    %s23 = sphi 0, %s21
    %s24 = sphi 0, %s22
    %s25 = sphi 0, %s23
    %s26 = sphi 0, %s24
    %s38 = sphi 0, %s40
    %s41 = sphi 0, %s38
    %s42 = sphi 0, %s41
    %s58 = sphi 0, %s42
    %s64 = sphi 0, %s66
    %s67 = sphi 0, %s64
    %s68 = sphi 0, %s67
    %s84 = sphi 0, %s68
    %s90 = sphi 0, %s92
    %s93 = sphi 0, %s90
    %s94 = sphi 0, %s93
    %s110 = sphi 0, %s94
    %s116 = sphi 0, %s118
    %s119 = sphi 0, %s116
    %s120 = sphi 0, %s119
    %s136 = sphi 0, %s120
    %s142 = sphi 0, %s144
    %s145 = sphi 0, %s142
    %s146 = sphi 0, %s145
    %s162 = sphi 0, %s146
    %s168 = sphi 0, %s170
    %s171 = sphi 0, %s168
    %s172 = sphi 0, %s171
    %s188 = sphi 0, %s172
    %s194 = sphi 0, %s196
    %s197 = sphi 0, %s194
    %s198 = sphi 0, %s197
    %s214 = sphi 0, %s198
    %s220 = sphi 0, %s222
    %s223 = sphi 0, %s220
    %s224 = sphi 0, %s223
    %s240 = sphi 0, %s224
    %s248 = sphi 0, %s250
    %s251 = sphi 0, %s248
    %s252 = sphi 0, %s251
    %s268 = sphi 0, %s252
  $region4: #{occnet_decoder.1} parent=0 // loop_header_branch
    %17 = sbr.rel (%p15) target = $region8
  $region5: #{occnet_decoder.1} parent=0 // loop_body
    %s19 = ssub.s32 %s14, 1
    %s20 = ssub.s32 %s14, 2
    %s27 = sadd.s32 1, %s22
    %p28 = scmp.ge.s32.totalorder %s27, 1
    %s29 = scalar_select %p28, 0, %s27
    %s30 = sadd.s32 1, %s21
    %s31 = scalar_select %p28, %s30, %s21
    %p32 = scmp.ge.s32.totalorder %s31, 2
    %s33 = scalar_select %p32, 0, %s31
    %s34 = ssub.s32 %s21, %s33
    %s35 = ssub.s32 %s22, %s29
    %s36 = sor.u32 %s34, %s35
    %p37 = scmp.eq.s32.totalorder %s36, 0
    %s39 = sadd.s32 %s38, 1
    %s40 = scalar_select %p37, %s38, %s39
    %p43 = pneg %p37
    %p44 = scmp.eq.s32.totalorder %s14, 1
    %p45 = por %p43, %p44
    %p46 = scmp.ne.s32.totalorder %s38, %s41
    %p47 = scmp.eq.s32.totalorder %s14, 0
    %p48 = por %p46, %p47
    %p49 = scmp.ne.s32.totalorder %s38, %s41
    %p50 = scmp.eq.s32.totalorder %s19, 1
    %p51 = por %p49, %p50
    %p52 = scmp.ne.s32.totalorder %s41, %s42
    %p53 = scmp.eq.s32.totalorder %s19, 0
    %p54 = por %p52, %p53
    %p55 = scmp.ne.s32.totalorder %s41, %s42
    %p56 = scmp.eq.s32.totalorder %s20, 1
    %p57 = por %p55, %p56
    %p59 = scmp.ne.s32.totalorder %s42, %s58
    %p60 = scmp.eq.s32.totalorder %s20, 0
    %p61 = por %p59, %p60
    %s62 = ssub.s32 %s21, %s33
    %p63 = scmp.eq.s32.totalorder %s62, 0
    %s65 = sadd.s32 %s64, 1
    %s66 = scalar_select %p63, %s64, %s65
    %p69 = pneg %p63
    %p70 = scmp.eq.s32.totalorder %s14, 1
    %p71 = por %p69, %p70
    %p72 = scmp.ne.s32.totalorder %s64, %s67
    %p73 = scmp.eq.s32.totalorder %s14, 0
    %p74 = por %p72, %p73
    %p75 = scmp.ne.s32.totalorder %s64, %s67
    %p76 = scmp.eq.s32.totalorder %s19, 1
    %p77 = por %p75, %p76
    %p78 = scmp.ne.s32.totalorder %s67, %s68
    %p79 = scmp.eq.s32.totalorder %s19, 0
    %p80 = por %p78, %p79
    %p81 = scmp.ne.s32.totalorder %s67, %s68
    %p82 = scmp.eq.s32.totalorder %s20, 1
    %p83 = por %p81, %p82
    %p85 = scmp.ne.s32.totalorder %s68, %s84
    %p86 = scmp.eq.s32.totalorder %s20, 0
    %p87 = por %p85, %p86
    %s88 = ssub.s32 %s21, %s33
    %p89 = scmp.eq.s32.totalorder %s88, 0
    %s91 = sadd.s32 %s90, 1
    %s92 = scalar_select %p89, %s90, %s91
    %p95 = pneg %p89
    %p96 = scmp.eq.s32.totalorder %s14, 1
    %p97 = por %p95, %p96
    %p98 = scmp.ne.s32.totalorder %s90, %s93
    %p99 = scmp.eq.s32.totalorder %s14, 0
    %p100 = por %p98, %p99
    %p101 = scmp.ne.s32.totalorder %s90, %s93
    %p102 = scmp.eq.s32.totalorder %s19, 1
    %p103 = por %p101, %p102
    %p104 = scmp.ne.s32.totalorder %s93, %s94
    %p105 = scmp.eq.s32.totalorder %s19, 0
    %p106 = por %p104, %p105
    %p107 = scmp.ne.s32.totalorder %s93, %s94
    %p108 = scmp.eq.s32.totalorder %s20, 1
    %p109 = por %p107, %p108
    %p111 = scmp.ne.s32.totalorder %s94, %s110
    %p112 = scmp.eq.s32.totalorder %s20, 0
    %p113 = por %p111, %p112
    %s114 = ssub.s32 %s21, %s33
    %p115 = scmp.eq.s32.totalorder %s114, 0
    %s117 = sadd.s32 %s116, 1
    %s118 = scalar_select %p115, %s116, %s117
    %p121 = pneg %p115
    %p122 = scmp.eq.s32.totalorder %s14, 1
    %p123 = por %p121, %p122
    %p124 = scmp.ne.s32.totalorder %s116, %s119
    %p125 = scmp.eq.s32.totalorder %s14, 0
    %p126 = por %p124, %p125
    %p127 = scmp.ne.s32.totalorder %s116, %s119
    %p128 = scmp.eq.s32.totalorder %s19, 1
    %p129 = por %p127, %p128
    %p130 = scmp.ne.s32.totalorder %s119, %s120
    %p131 = scmp.eq.s32.totalorder %s19, 0
    %p132 = por %p130, %p131
    %p133 = scmp.ne.s32.totalorder %s119, %s120
    %p134 = scmp.eq.s32.totalorder %s20, 1
    %p135 = por %p133, %p134
    %p137 = scmp.ne.s32.totalorder %s120, %s136
    %p138 = scmp.eq.s32.totalorder %s20, 0
    %p139 = por %p137, %p138
    %s140 = ssub.s32 %s21, %s33
    %p141 = scmp.eq.s32.totalorder %s140, 0
    %s143 = sadd.s32 %s142, 1
    %s144 = scalar_select %p141, %s142, %s143
    %p147 = pneg %p141
    %p148 = scmp.eq.s32.totalorder %s14, 1
    %p149 = por %p147, %p148
    %p150 = scmp.ne.s32.totalorder %s142, %s145
    %p151 = scmp.eq.s32.totalorder %s14, 0
    %p152 = por %p150, %p151
    %p153 = scmp.ne.s32.totalorder %s142, %s145
    %p154 = scmp.eq.s32.totalorder %s19, 1
    %p155 = por %p153, %p154
    %p156 = scmp.ne.s32.totalorder %s145, %s146
    %p157 = scmp.eq.s32.totalorder %s19, 0
    %p158 = por %p156, %p157
    %p159 = scmp.ne.s32.totalorder %s145, %s146
    %p160 = scmp.eq.s32.totalorder %s20, 1
    %p161 = por %p159, %p160
    %p163 = scmp.ne.s32.totalorder %s146, %s162
    %p164 = scmp.eq.s32.totalorder %s20, 0
    %p165 = por %p163, %p164
    %s166 = ssub.s32 %s21, %s33
    %p167 = scmp.eq.s32.totalorder %s166, 0
    %s169 = sadd.s32 %s168, 1
    %s170 = scalar_select %p167, %s168, %s169
    %p173 = pneg %p167
    %p174 = scmp.eq.s32.totalorder %s14, 1
    %p175 = por %p173, %p174
    %p176 = scmp.ne.s32.totalorder %s168, %s171
    %p177 = scmp.eq.s32.totalorder %s14, 0
    %p178 = por %p176, %p177
    %p179 = scmp.ne.s32.totalorder %s168, %s171
    %p180 = scmp.eq.s32.totalorder %s19, 1
    %p181 = por %p179, %p180
    %p182 = scmp.ne.s32.totalorder %s171, %s172
    %p183 = scmp.eq.s32.totalorder %s19, 0
    %p184 = por %p182, %p183
    %p185 = scmp.ne.s32.totalorder %s171, %s172
    %p186 = scmp.eq.s32.totalorder %s20, 1
    %p187 = por %p185, %p186
    %p189 = scmp.ne.s32.totalorder %s172, %s188
    %p190 = scmp.eq.s32.totalorder %s20, 0
    %p191 = por %p189, %p190
    %s192 = ssub.s32 %s21, %s33
    %p193 = scmp.eq.s32.totalorder %s192, 0
    %s195 = sadd.s32 %s194, 1
    %s196 = scalar_select %p193, %s194, %s195
    %p199 = pneg %p193
    %p200 = scmp.eq.s32.totalorder %s14, 1
    %p201 = por %p199, %p200
    %p202 = scmp.ne.s32.totalorder %s194, %s197
    %p203 = scmp.eq.s32.totalorder %s14, 0
    %p204 = por %p202, %p203
    %p205 = scmp.ne.s32.totalorder %s194, %s197
    %p206 = scmp.eq.s32.totalorder %s19, 1
    %p207 = por %p205, %p206
    %p208 = scmp.ne.s32.totalorder %s197, %s198
    %p209 = scmp.eq.s32.totalorder %s19, 0
    %p210 = por %p208, %p209
    %p211 = scmp.ne.s32.totalorder %s197, %s198
    %p212 = scmp.eq.s32.totalorder %s20, 1
    %p213 = por %p211, %p212
    %p215 = scmp.ne.s32.totalorder %s198, %s214
    %p216 = scmp.eq.s32.totalorder %s20, 0
    %p217 = por %p215, %p216
    %s218 = ssub.s32 %s21, %s33
    %p219 = scmp.eq.s32.totalorder %s218, 0
    %s221 = sadd.s32 %s220, 1
    %s222 = scalar_select %p219, %s220, %s221
    %p225 = pneg %p219
    %p226 = scmp.eq.s32.totalorder %s14, 1
    %p227 = por %p225, %p226
    %p228 = scmp.ne.s32.totalorder %s220, %s223
    %p229 = scmp.eq.s32.totalorder %s14, 0
    %p230 = por %p228, %p229
    %p231 = scmp.ne.s32.totalorder %s220, %s223
    %p232 = scmp.eq.s32.totalorder %s19, 1
    %p233 = por %p231, %p232
    %p234 = scmp.ne.s32.totalorder %s223, %s224
    %p235 = scmp.eq.s32.totalorder %s19, 0
    %p236 = por %p234, %p235
    %p237 = scmp.ne.s32.totalorder %s223, %s224
    %p238 = scmp.eq.s32.totalorder %s20, 1
    %p239 = por %p237, %p238
    %p241 = scmp.ne.s32.totalorder %s224, %s240
    %p242 = scmp.eq.s32.totalorder %s20, 0
    %p243 = por %p241, %p242
    %s244 = ssub.s32 %s21, %s33
    %s245 = ssub.s32 %s22, %s29
    %s246 = sor.u32 %s244, %s245
    %p247 = scmp.eq.s32.totalorder %s246, 0
    %s249 = sadd.s32 %s248, 1
    %s250 = scalar_select %p247, %s248, %s249
    %p253 = pneg %p247
    %p254 = scmp.eq.s32.totalorder %s14, 1
    %p255 = por %p253, %p254
    %p256 = scmp.ne.s32.totalorder %s248, %s251
    %p257 = scmp.eq.s32.totalorder %s14, 0
    %p258 = por %p256, %p257
    %p259 = scmp.ne.s32.totalorder %s248, %s251
    %p260 = scmp.eq.s32.totalorder %s19, 1
    %p261 = por %p259, %p260
    %p262 = scmp.ne.s32.totalorder %s251, %s252
    %p263 = scmp.eq.s32.totalorder %s19, 0
    %p264 = por %p262, %p263
    %p265 = scmp.ne.s32.totalorder %s251, %s252
    %p266 = scmp.eq.s32.totalorder %s20, 1
    %p267 = por %p265, %p266
    %p269 = scmp.ne.s32.totalorder %s252, %s268
    %p270 = scmp.eq.s32.totalorder %s20, 0
    %p271 = por %p269, %p270
    %p272 = scmp.le.s32.totalorder 1, %s14
    %p273 = scmp.lt.s32.totalorder %s14, 3
    %p274 = pnand %p272, %p273
    %p275 = pneg %p274
    // Predicated region
    $region9: #{occnet_decoder.1} parent=5 // pred_check
      _
    $region10: #{occnet_decoder.1} parent=5 // pred_check_branch
      %277 = sbr.rel (%p274) target = $region12
    $region11: #{occnet_decoder.1} parent=5 // pred_region
      %s278 = ssub.s32 %s14, 1
    $region12: #{occnet_decoder.1} parent=5 // pred_fallthru
      _
    %p279 = scmp.lt.s32.totalorder %s14, 2
    // Predicated region
    $region13: #{occnet_decoder.1} parent=5 // pred_check
      %p280 = pneg %p279
    $region14: #{occnet_decoder.1} parent=5 // pred_check_branch
      %282 = sbr.rel (%p280) target = $region16
    $region15: #{occnet_decoder.1} parent=5 // pred_region
      // Predicated region
      $region17: #{occnet_decoder.1} parent=15 // pred_check
        %p283 = pneg %p48
      $region18: #{occnet_decoder.1} parent=15 // pred_check_branch
        %285 = sbr.rel (%p283) target = $region20
      $region19: #{occnet_decoder.1} parent=15 // pred_region
        %s286 = smul.u32 2, %s22
        %p287 = scmp.lt.s32.totalorder %s21, 1
        %s288 = scalar_select %p287, %s21, 1
        %p289 = scmp.lt.s32.totalorder %s286, 1
        %s290 = scalar_select %p289, %s286, 1
        %s291 = smul.addr %s288, 2
        %s292 = sadd.s32 %s290, %s291
        %s293 = smul.addr %s292, 8
        %s294 = scalar_lea.vmem %s0, %s293
        %s295 = smul.u32 2, %s22
      $region20: #{occnet_decoder.1} parent=15 // pred_fallthru
        _
      // Predicated region
      $region21: #{occnet_decoder.1} parent=15 // pred_check
        %p296 = pneg %p74
      $region22: #{occnet_decoder.1} parent=15 // pred_check_branch
        %298 = sbr.rel (%p296) target = $region24
      $region23: #{occnet_decoder.1} parent=15 // pred_region
        %p299 = scmp.lt.s32.totalorder %s21, 1
        %s300 = scalar_select %p299, %s21, 1
        %s301 = smul.addr %s300, 4
        %s302 = smul.addr %s301, 8
        %s303 = scalar_lea.vmem %s1, %s302
      $region24: #{occnet_decoder.1} parent=15 // pred_fallthru
        _
      // Predicated region
      $region25: #{occnet_decoder.1} parent=15 // pred_check
        %p304 = pneg %p100
      $region26: #{occnet_decoder.1} parent=15 // pred_check_branch
        %306 = sbr.rel (%p304) target = $region28
      $region27: #{occnet_decoder.1} parent=15 // pred_region
        %p307 = scmp.lt.s32.totalorder %s21, 1
        %s308 = scalar_select %p307, %s21, 1
        %s309 = smul.addr %s308, 4
        %s310 = smul.addr %s309, 8
        %s311 = scalar_lea.vmem %s2, %s310
      $region28: #{occnet_decoder.1} parent=15 // pred_fallthru
        _
      // Predicated region
      $region29: #{occnet_decoder.1} parent=15 // pred_check
        %p312 = pneg %p126
      $region30: #{occnet_decoder.1} parent=15 // pred_check_branch
        %314 = sbr.rel (%p312) target = $region32
      $region31: #{occnet_decoder.1} parent=15 // pred_region
        %p315 = scmp.lt.s32.totalorder %s21, 1
        %s316 = scalar_select %p315, %s21, 1
        %s317 = smul.addr %s316, 4
        %s318 = smul.addr %s317, 8
        %s319 = scalar_lea.vmem %s3, %s318
      $region32: #{occnet_decoder.1} parent=15 // pred_fallthru
        _
      // Predicated region
      $region33: #{occnet_decoder.1} parent=15 // pred_check
        %p320 = pneg %p152
      $region34: #{occnet_decoder.1} parent=15 // pred_check_branch
        %322 = sbr.rel (%p320) target = $region36
      $region35: #{occnet_decoder.1} parent=15 // pred_region
        %p323 = scmp.lt.s32.totalorder %s21, 1
        %s324 = scalar_select %p323, %s21, 1
        %s325 = smul.addr %s324, 4
        %s326 = smul.addr %s325, 8
        %s327 = scalar_lea.vmem %s4, %s326
      $region36: #{occnet_decoder.1} parent=15 // pred_fallthru
        _
      // Predicated region
      $region37: #{occnet_decoder.1} parent=15 // pred_check
        %p328 = pneg %p178
      $region38: #{occnet_decoder.1} parent=15 // pred_check_branch
        %330 = sbr.rel (%p328) target = $region40
      $region39: #{occnet_decoder.1} parent=15 // pred_region
        %p331 = scmp.lt.s32.totalorder %s21, 1
        %s332 = scalar_select %p331, %s21, 1
        %s333 = scalar_lea.vmem %s5, %s332
      $region40: #{occnet_decoder.1} parent=15 // pred_fallthru
        _
      // Predicated region
      $region41: #{occnet_decoder.1} parent=15 // pred_check
        %p334 = pneg %p204
      $region42: #{occnet_decoder.1} parent=15 // pred_check_branch
        %336 = sbr.rel (%p334) target = $region44
      $region43: #{occnet_decoder.1} parent=15 // pred_region
        %p337 = scmp.lt.s32.totalorder %s21, 1
        %s338 = scalar_select %p337, %s21, 1
        %s339 = scalar_lea.vmem %s6, %s338
      $region44: #{occnet_decoder.1} parent=15 // pred_fallthru
        _
      // Predicated region
      $region45: #{occnet_decoder.1} parent=15 // pred_check
        %p340 = pneg %p230
      $region46: #{occnet_decoder.1} parent=15 // pred_check_branch
        %342 = sbr.rel (%p340) target = $region48
      $region47: #{occnet_decoder.1} parent=15 // pred_region
        %p343 = scmp.lt.s32.totalorder %s21, 1
        %s344 = scalar_select %p343, %s21, 1
        %s345 = scalar_lea.vmem %s7, %s344
      $region48: #{occnet_decoder.1} parent=15 // pred_fallthru
        _
    $region16: #{occnet_decoder.1} parent=5 // pred_fallthru
      _
    %p346 = scmp.le.s32.totalorder 1, %s14
    %p347 = scmp.lt.s32.totalorder %s14, 3
    %p348 = pnand %p346, %p347
    %p349 = pneg %p348
    // Predicated region
    $region49: #{occnet_decoder.1} parent=5 // pred_check
      _
    $region50: #{occnet_decoder.1} parent=5 // pred_check_branch
      %351 = sbr.rel (%p348) target = $region52
    $region51: #{occnet_decoder.1} parent=5 // pred_region
      %s352 = ssub.s32 %s14, 1
      %s353 = smul.u32 2, %s24
      %p354 = scmp.lt.s32.totalorder %s23, 1
      %s355 = scalar_select %p354, %s23, 1
      %p356 = scmp.lt.s32.totalorder %s353, 1
      %s357 = scalar_select %p356, %s353, 1
      %s358 = smul.addr %s355, 2
      %s359 = sadd.s32 %s357, %s358
      %s360 = smul.addr %s359, 8
      %s361 = scalar_lea.vmem %s0, %s360
      %p362 = pneg %p54
      %p363 = pneg %p51
      %p364 = scmp.lt.s32.totalorder %s23, 1
      %s365 = scalar_select %p364, %s23, 1
      %s366 = smul.addr %s365, 4
      %s367 = smul.addr %s366, 8
      %s368 = scalar_lea.vmem %s1, %s367
      %p369 = pneg %p80
      %p370 = pneg %p77
      %p371 = scmp.lt.s32.totalorder %s23, 1
      %s372 = scalar_select %p371, %s23, 1
      %s373 = smul.addr %s372, 4
      %s374 = smul.addr %s373, 8
      %s375 = scalar_lea.vmem %s2, %s374
      %p376 = pneg %p106
      %p377 = pneg %p103
      %p378 = scmp.lt.s32.totalorder %s23, 1
      %s379 = scalar_select %p378, %s23, 1
      %s380 = smul.addr %s379, 4
      %s381 = smul.addr %s380, 8
      %s382 = scalar_lea.vmem %s3, %s381
      %p383 = pneg %p132
      %p384 = pneg %p129
      %p385 = scmp.lt.s32.totalorder %s23, 1
      %s386 = scalar_select %p385, %s23, 1
      %s387 = smul.addr %s386, 4
      %s388 = smul.addr %s387, 8
      %s389 = scalar_lea.vmem %s4, %s388
      %p390 = pneg %p158
      %p391 = pneg %p155
      %p392 = scmp.lt.s32.totalorder %s23, 1
      %s393 = scalar_select %p392, %s23, 1
      %s394 = scalar_lea.vmem %s5, %s393
      %p395 = pneg %p184
      %p396 = pneg %p181
      %p397 = scmp.lt.s32.totalorder %s23, 1
      %s398 = scalar_select %p397, %s23, 1
      %s399 = scalar_lea.vmem %s6, %s398
      %p400 = pneg %p210
      %p401 = pneg %p207
      %p402 = scmp.lt.s32.totalorder %s23, 1
      %s403 = scalar_select %p402, %s23, 1
      %s404 = scalar_lea.vmem %s7, %s403
      %p405 = pneg %p236
      %p406 = pneg %p233
      %p407 = pneg %p264
      %p408 = pneg %p261
      %s409 = smul.u32 2, %s24
      %p410 = scmp.lt.s32.totalorder %s23, 1
      %s411 = scalar_select %p410, %s23, 1
      %p412 = scmp.lt.s32.totalorder %s409, 1
      %s413 = scalar_select %p412, %s409, 1
      %s414 = smul.addr %s411, 2
      %s415 = sadd.s32 %s413, %s414
      %s416 = scalar_lea.vmem %s8, %s415
      %s417 = smul.u32 2, %s24
      %p418 = scmp.lt.s32.totalorder %s23, 1
      %s419 = scalar_select %p418, %s23, 1
      %p420 = scmp.lt.s32.totalorder %s417, 1
      %s421 = scalar_select %p420, %s417, 1
      %s422 = smul.addr %s419, 2
      %s423 = sadd.s32 %s421, %s422
      %s424 = smul.addr %s423, 8
      %s425 = scalar_lea.vmem %s0, %s424
      %s426 = smul.u32 2, %s24
      %p427 = scmp.lt.s32.totalorder %s23, 1
      %s428 = scalar_select %p427, %s23, 1
      %s429 = smul.addr %s428, 4
      %s430 = smul.addr %s429, 8
      %s431 = scalar_lea.vmem %s1, %s430
      %p432 = scmp.lt.s32.totalorder %s23, 1
      %s433 = scalar_select %p432, %s23, 1
      %s434 = smul.addr %s433, 4
      %s435 = smul.addr %s434, 8
      %s436 = scalar_lea.vmem %s2, %s435
      %p437 = scmp.lt.s32.totalorder %s23, 1
      %s438 = scalar_select %p437, %s23, 1
      %s439 = smul.addr %s438, 4
      %s440 = smul.addr %s439, 8
      %s441 = scalar_lea.vmem %s3, %s440
      %p442 = scmp.lt.s32.totalorder %s23, 1
      %s443 = scalar_select %p442, %s23, 1
      %s444 = smul.addr %s443, 4
      %s445 = smul.addr %s444, 8
      %s446 = scalar_lea.vmem %s4, %s445
      %p447 = scmp.lt.s32.totalorder %s23, 1
      %s448 = scalar_select %p447, %s23, 1
      %s449 = scalar_lea.vmem %s5, %s448
      %p450 = scmp.lt.s32.totalorder %s23, 1
      %s451 = scalar_select %p450, %s23, 1
      %s452 = scalar_lea.vmem %s6, %s451
      %p453 = scmp.lt.s32.totalorder %s23, 1
      %s454 = scalar_select %p453, %s23, 1
      %s455 = scalar_lea.vmem %s7, %s454
      %s456 = smul.u32 2, %s24
      %p457 = scmp.lt.s32.totalorder %s23, 1
      %s458 = scalar_select %p457, %s23, 1
      %p459 = scmp.lt.s32.totalorder %s456, 1
      %s460 = scalar_select %p459, %s456, 1
      %s461 = smul.addr %s458, 2
      %s462 = sadd.s32 %s460, %s461
      %s463 = scalar_lea.vmem %s8, %s462
      %s464 = smul.u32 2, %s24
      %v465 = vld [vmem:[%s425] sm:$0xff]
      %v466 = vld [vmem:[%s425 + $0x8] sm:$0xff]
      %v467 = vld [vmem:[%s431] sm:$0xff]
      %v468 = vld [vmem:[%s431 + $0x8] sm:$0xff]
      %v469 = vld [vmem:[%s431 + $0x10] sm:$0xff]
      %v470 = vld [vmem:[%s431 + $0x18] sm:$0xff]
      %v471 = vld [vmem:[%s436] sm:$0xff]
      %v472 = vld [vmem:[%s436 + $0x8] sm:$0xff]
      %v473 = vld [vmem:[%s436 + $0x10] sm:$0xff]
      %v474 = vld [vmem:[%s436 + $0x18] sm:$0xff]
      %476 = vset.pattern.permute.xlu0 0
      %477 = vperm.xlu0 %476, %v471
      %v478 = vpop.permute.xlu0 %477
      %481 = vset.pattern.permute.xlu0 0
      %482 = vperm.xlu0 %481, %v472
      %v483 = vpop.permute.xlu0 %482
      %486 = vset.pattern.permute.xlu0 0
      %487 = vperm.xlu0 %486, %v473
      %v488 = vpop.permute.xlu0 %487
      %491 = vset.pattern.permute.xlu0 0
      %492 = vperm.xlu0 %491, %v474
      %v493 = vpop.permute.xlu0 %492
      %vm495 = vcmask 64512
      %v497 = vsel %vm495, %v467, 0
      %v500 = vsel %vm495, %v468, 0
      %v503 = vsel %vm495, %v469, 0
      %v506 = vsel %vm495, %v470, 0
      %508 = vmatprep.subr.mxu0 %v466
      %509 = vmatpush1.msra.mxu0 %v465
      %510 = vmatprep.subr.mxu0 0.0
      %511 = vmatpush1.msra.mxu0 0.0
      %512 = vmatprep.subr.mxu0 0.0
      %513 = vmatpush1.msra.mxu0 0.0
      %514 = vmatprep.subr.mxu0 0.0
      %515 = vmatpush1.msra.mxu0 0.0
      %516 = vmatprep.subr.mxu0 0.0
      %517 = vmatpush1.msra.mxu0 0.0
      %518 = vmatprep.subr.mxu0 0.0
      %519 = vmatpush1.msra.mxu0 0.0
      %520 = vmatprep.subr.mxu0 0.0
      %521 = vmatpush1.msra.mxu0 0.0
      %522 = vmatprep.subr.mxu0 0.0
      %523 = vmatpush1.msra.mxu0 0.0
      %524 = vmatprep.subr.mxu0 0.0
      %525 = vmatpush1.msra.mxu0 0.0
      %526 = vmatprep.subr.mxu0 0.0
      %527 = vmatpush1.msra.mxu0 0.0
      %528 = vmatprep.subr.mxu0 0.0
      %529 = vmatpush1.msra.mxu0 0.0
      %530 = vmatprep.subr.mxu0 0.0
      %531 = vmatpush1.msra.mxu0 0.0
      %532 = vmatprep.subr.mxu0 0.0
      %533 = vmatpush1.msra.mxu0 0.0
      %534 = vmatprep.subr.mxu0 0.0
      %535 = vmatpush1.msra.mxu0 0.0
      %536 = vmatprep.subr.mxu0 0.0
      %537 = vmatpush1.msra.mxu0 0.0
      %538 = vmatprep.subr.mxu0 0.0
      %539 = vmatpush1.msra.mxu0 0.0
      %540 = vmatprep.subr.mxu0 0.0
      %541 = vmatpush1.msra.mxu0 0.0
      %542 = vmatprep.subr.mxu0 0.0
      %543 = vmatpush1.msra.mxu0 0.0
      %544 = vmatprep.subr.mxu0 0.0
      %545 = vmatpush1.msra.mxu0 0.0
      %546 = vmatprep.subr.mxu0 0.0
      %547 = vmatpush1.msra.mxu0 0.0
      %548 = vmatprep.subr.mxu0 0.0
      %549 = vmatpush1.msra.mxu0 0.0
      %550 = vmatprep.subr.mxu0 0.0
      %551 = vmatpush1.msra.mxu0 0.0
      %552 = vmatprep.subr.mxu0 0.0
      %553 = vmatpush1.msra.mxu0 0.0
      %554 = vmatprep.subr.mxu0 0.0
      %555 = vmatpush1.msra.mxu0 0.0
      %556 = vmatprep.subr.mxu0 0.0
      %557 = vmatpush1.msra.mxu0 0.0
      %558 = vmatprep.subr.mxu0 0.0
      %559 = vmatpush1.msra.mxu0 0.0
      %560 = vmatprep.subr.mxu0 0.0
      %561 = vmatpush1.msra.mxu0 0.0
      %562 = vmatprep.subr.mxu0 0.0
      %563 = vmatpush1.msra.mxu0 0.0
      %564 = vmatprep.subr.mxu0 0.0
      %565 = vmatpush1.msra.mxu0 0.0
      %566 = vmatprep.subr.mxu0 0.0
      %567 = vmatpush1.msra.mxu0 0.0
      %568 = vmatprep.subr.mxu0 0.0
      %569 = vmatpush1.msra.mxu0 0.0
      %570 = vmatprep.subr.mxu0 0.0
      %571 = vmatpush1.msra.mxu0 0.0
      %572 = vmatprep.mubr.f32.mxu0 0.0
      %573 = vmatmul.mubr.f32.gmra.mrb[0].mxu0 %v497
      %v574 = vpop.f32.mrb[0].mxu0
      %v575 = vadd.f32 %v478, %v574
      %v576 = vpop.f32.mrb[0].mxu0
      %v577 = vadd.f32 %v478, %v576
      %578 = vmatprep.mubr.f32.mxu0 0.0
      %579 = vmatmul.mubr.f32.gmra.mrb[0].mxu0 %v500
      %v580 = vpop.f32.mrb[0].mxu0
      %v581 = vadd.f32 %v483, %v580
      %v582 = vpop.f32.mrb[0].mxu0
      %v583 = vadd.f32 %v483, %v582
      %584 = vmatprep.mubr.f32.mxu0 0.0
      %585 = vmatmul.mubr.f32.gmra.mrb[0].mxu0 %v503
      %v586 = vpop.f32.mrb[0].mxu0
      %v587 = vadd.f32 %v488, %v586
      %v588 = vpop.f32.mrb[0].mxu0
      %v589 = vadd.f32 %v488, %v588
      %590 = vmatprep.mubr.f32.mxu0 0.0
      %591 = vmatmul.mubr.f32.gmra.mrb[0].mxu0 %v506
      %v592 = vpop.f32.mrb[0].mxu0
      %v593 = vadd.f32 %v493, %v592
      %v594 = vpop.f32.mrb[0].mxu0
      %v595 = vadd.f32 %v493, %v594
      %596 = vdwg.mxu0
      %v597 = vld [vmem:[%s441] sm:$0xff]
      %v598 = vld [vmem:[%s441 + $0x8] sm:$0xff]
      %v599 = vld [vmem:[%s441 + $0x10] sm:$0xff]
      %v600 = vld [vmem:[%s441 + $0x18] sm:$0xff]
      %v601 = vmax.f32 %v575, 0.0
      %v602 = vmax.f32 %v577, 0.0
      %v603 = vmax.f32 %v581, 0.0
      %v604 = vmax.f32 %v583, 0.0
      %v605 = vmax.f32 %v587, 0.0
      %v606 = vmax.f32 %v589, 0.0
      %v607 = vmax.f32 %v593, 0.0
      %v608 = vmax.f32 %v595, 0.0
      %v609 = vld [vmem:[%s446] sm:$0xff]
      %v610 = vld [vmem:[%s446 + $0x8] sm:$0xff]
      %v611 = vld [vmem:[%s446 + $0x10] sm:$0xff]
      %v612 = vld [vmem:[%s446 + $0x18] sm:$0xff]
      %614 = vset.pattern.permute.xlu0 0
      %615 = vperm.xlu0 %614, %v609
      %v616 = vpop.permute.xlu0 %615
      %619 = vset.pattern.permute.xlu0 0
      %620 = vperm.xlu0 %619, %v610
      %v621 = vpop.permute.xlu0 %620
      %624 = vset.pattern.permute.xlu0 0
      %625 = vperm.xlu0 %624, %v611
      %v626 = vpop.permute.xlu0 %625
      %629 = vset.pattern.permute.xlu0 0
      %630 = vperm.xlu0 %629, %v612
      %v631 = vpop.permute.xlu0 %630
      %vm633 = vcmask 261120
      %v635 = vsel %vm633, %v597, 0
      %v638 = vsel %vm633, %v598, 0
      %v641 = vsel %vm633, %v599, 0
      %v644 = vsel %vm633, %v600, 0
      %646 = vmatprep.subr.mxu0 %v602
      %647 = vmatpush1.msra.mxu0 %v601
      %648 = vmatprep.subr.mxu0 %v604
      %649 = vmatpush1.msra.mxu0 %v603
      %650 = vmatprep.subr.mxu0 %v606
      %651 = vmatpush1.msra.mxu0 %v605
      %652 = vmatprep.subr.mxu0 %v608
      %653 = vmatpush1.msra.mxu0 %v607
      %654 = vmatprep.subr.mxu0 0.0
      %655 = vmatpush1.msra.mxu0 0.0
      %656 = vmatprep.subr.mxu0 0.0
      %657 = vmatpush1.msra.mxu0 0.0
      %658 = vmatprep.subr.mxu0 0.0
      %659 = vmatpush1.msra.mxu0 0.0
      %660 = vmatprep.subr.mxu0 0.0
      %661 = vmatpush1.msra.mxu0 0.0
      %662 = vmatprep.subr.mxu0 0.0
      %663 = vmatpush1.msra.mxu0 0.0
      %664 = vmatprep.subr.mxu0 0.0
      %665 = vmatpush1.msra.mxu0 0.0
      %666 = vmatprep.subr.mxu0 0.0
      %667 = vmatpush1.msra.mxu0 0.0
      %668 = vmatprep.subr.mxu0 0.0
      %669 = vmatpush1.msra.mxu0 0.0
      %670 = vmatprep.subr.mxu0 0.0
      %671 = vmatpush1.msra.mxu0 0.0
      %672 = vmatprep.subr.mxu0 0.0
      %673 = vmatpush1.msra.mxu0 0.0
      %674 = vmatprep.subr.mxu0 0.0
      %675 = vmatpush1.msra.mxu0 0.0
      %676 = vmatprep.subr.mxu0 0.0
      %677 = vmatpush1.msra.mxu0 0.0
      %678 = vmatprep.subr.mxu0 0.0
      %679 = vmatpush1.msra.mxu0 0.0
      %680 = vmatprep.subr.mxu0 0.0
      %681 = vmatpush1.msra.mxu0 0.0
      %682 = vmatprep.subr.mxu0 0.0
      %683 = vmatpush1.msra.mxu0 0.0
      %684 = vmatprep.subr.mxu0 0.0
      %685 = vmatpush1.msra.mxu0 0.0
      %686 = vmatprep.subr.mxu0 0.0
      %687 = vmatpush1.msra.mxu0 0.0
      %688 = vmatprep.subr.mxu0 0.0
      %689 = vmatpush1.msra.mxu0 0.0
      %690 = vmatprep.subr.mxu0 0.0
      %691 = vmatpush1.msra.mxu0 0.0
      %692 = vmatprep.subr.mxu0 0.0
      %693 = vmatpush1.msra.mxu0 0.0
      %694 = vmatprep.subr.mxu0 0.0
      %695 = vmatpush1.msra.mxu0 0.0
      %696 = vmatprep.subr.mxu0 0.0
      %697 = vmatpush1.msra.mxu0 0.0
      %698 = vmatprep.subr.mxu0 0.0
      %699 = vmatpush1.msra.mxu0 0.0
      %700 = vmatprep.subr.mxu0 0.0
      %701 = vmatpush1.msra.mxu0 0.0
      %702 = vmatprep.subr.mxu0 0.0
      %703 = vmatpush1.msra.mxu0 0.0
      %704 = vmatprep.subr.mxu0 0.0
      %705 = vmatpush1.msra.mxu0 0.0
      %706 = vmatprep.subr.mxu0 0.0
      %707 = vmatpush1.msra.mxu0 0.0
      %708 = vmatprep.subr.mxu0 0.0
      %709 = vmatpush1.msra.mxu0 0.0
      %710 = vmatprep.mubr.f32.mxu0 0.0
      %711 = vmatmul.mubr.f32.gmra.mrb[0].mxu0 %v635
      %v712 = vpop.f32.mrb[0].mxu0
      %v713 = vadd.f32 %v616, %v712
      %v714 = vpop.f32.mrb[0].mxu0
      %v715 = vadd.f32 %v616, %v714
      %716 = vmatprep.mubr.f32.mxu0 0.0
      %717 = vmatmul.mubr.f32.gmra.mrb[0].mxu0 %v638
      %v718 = vpop.f32.mrb[0].mxu0
      %v719 = vadd.f32 %v621, %v718
      %v720 = vpop.f32.mrb[0].mxu0
      %v721 = vadd.f32 %v621, %v720
      %722 = vmatprep.mubr.f32.mxu0 0.0
      %723 = vmatmul.mubr.f32.gmra.mrb[0].mxu0 %v641
      %v724 = vpop.f32.mrb[0].mxu0
      %v725 = vadd.f32 %v626, %v724
      %v726 = vpop.f32.mrb[0].mxu0
      %v727 = vadd.f32 %v626, %v726
      %728 = vmatprep.mubr.f32.mxu0 0.0
      %729 = vmatmul.mubr.f32.gmra.mrb[0].mxu0 %v644
      %v730 = vpop.f32.mrb[0].mxu0
      %v731 = vadd.f32 %v631, %v730
      %v732 = vpop.f32.mrb[0].mxu0
      %v733 = vadd.f32 %v631, %v732
      %734 = vdwg.mxu0
      %v735 = vld [vmem:[%s449] sm:$0x1]
      %v736 = vld [vmem:[%s452] sm:$0x1]
      %v737 = vmax.f32 %v713, 0.0
      %v738 = vmax.f32 %v715, 0.0
      %v739 = vmax.f32 %v719, 0.0
      %v740 = vmax.f32 %v721, 0.0
      %v741 = vmax.f32 %v725, 0.0
      %v742 = vmax.f32 %v727, 0.0
      %v743 = vmax.f32 %v731, 0.0
      %v744 = vmax.f32 %v733, 0.0
      %v746 = vsel %vm633, %v736, 0
      %748 = vmatprep.subr.mxu0 %v738
      %749 = vmatpush1.msra.mxu0 %v737
      %750 = vmatprep.subr.mxu0 %v740
      %751 = vmatpush1.msra.mxu0 %v739
      %752 = vmatprep.subr.mxu0 %v742
      %753 = vmatpush1.msra.mxu0 %v741
      %754 = vmatprep.subr.mxu0 %v744
      %755 = vmatpush1.msra.mxu0 %v743
      %756 = vmatprep.subr.mxu0 0.0
      %757 = vmatpush1.msra.mxu0 0.0
      %758 = vmatprep.subr.mxu0 0.0
      %759 = vmatpush1.msra.mxu0 0.0
      %760 = vmatprep.subr.mxu0 0.0
      %761 = vmatpush1.msra.mxu0 0.0
      %762 = vmatprep.subr.mxu0 0.0
      %763 = vmatpush1.msra.mxu0 0.0
      %764 = vmatprep.subr.mxu0 0.0
      %765 = vmatpush1.msra.mxu0 0.0
      %766 = vmatprep.subr.mxu0 0.0
      %767 = vmatpush1.msra.mxu0 0.0
      %768 = vmatprep.subr.mxu0 0.0
      %769 = vmatpush1.msra.mxu0 0.0
      %770 = vmatprep.subr.mxu0 0.0
      %771 = vmatpush1.msra.mxu0 0.0
      %772 = vmatprep.subr.mxu0 0.0
      %773 = vmatpush1.msra.mxu0 0.0
      %774 = vmatprep.subr.mxu0 0.0
      %775 = vmatpush1.msra.mxu0 0.0
      %776 = vmatprep.subr.mxu0 0.0
      %777 = vmatpush1.msra.mxu0 0.0
      %778 = vmatprep.subr.mxu0 0.0
      %779 = vmatpush1.msra.mxu0 0.0
      %780 = vmatprep.subr.mxu0 0.0
      %781 = vmatpush1.msra.mxu0 0.0
      %782 = vmatprep.subr.mxu0 0.0
      %783 = vmatpush1.msra.mxu0 0.0
      %784 = vmatprep.subr.mxu0 0.0
      %785 = vmatpush1.msra.mxu0 0.0
      %786 = vmatprep.subr.mxu0 0.0
      %787 = vmatpush1.msra.mxu0 0.0
      %788 = vmatprep.subr.mxu0 0.0
      %789 = vmatpush1.msra.mxu0 0.0
      %790 = vmatprep.subr.mxu0 0.0
      %791 = vmatpush1.msra.mxu0 0.0
      %792 = vmatprep.subr.mxu0 0.0
      %793 = vmatpush1.msra.mxu0 0.0
      %794 = vmatprep.subr.mxu0 0.0
      %795 = vmatpush1.msra.mxu0 0.0
      %796 = vmatprep.subr.mxu0 0.0
      %797 = vmatpush1.msra.mxu0 0.0
      %798 = vmatprep.subr.mxu0 0.0
      %799 = vmatpush1.msra.mxu0 0.0
      %800 = vmatprep.subr.mxu0 0.0
      %801 = vmatpush1.msra.mxu0 0.0
      %802 = vmatprep.subr.mxu0 0.0
      %803 = vmatpush1.msra.mxu0 0.0
      %804 = vmatprep.subr.mxu0 0.0
      %805 = vmatpush1.msra.mxu0 0.0
      %806 = vmatprep.subr.mxu0 0.0
      %807 = vmatpush1.msra.mxu0 0.0
      %808 = vmatprep.subr.mxu0 0.0
      %809 = vmatpush1.msra.mxu0 0.0
      %810 = vmatprep.subr.mxu0 0.0
      %811 = vmatpush1.msra.mxu0 0.0
      %812 = vmatprep.mubr.f32.mxu0 0.0
      %813 = vmatmul.mubr.f32.gmra.mrb[0].mxu0 %v746
      %v814 = vpop.f32.mrb[0].mxu0
      %v815 = vadd.f32 0.0, %v814
      %v816 = vpop.f32.mrb[0].mxu0
      %v817 = vadd.f32 0.0, %v816
      %818 = vdwg.mxu0
      %v820 = vsel %vm633, %v735, 0
      %822 = vmatprep.subr.mxu0 %v577
      %823 = vmatpush1.msra.mxu0 %v575
      %824 = vmatprep.subr.mxu0 %v583
      %825 = vmatpush1.msra.mxu0 %v581
      %826 = vmatprep.subr.mxu0 %v589
      %827 = vmatpush1.msra.mxu0 %v587
      %828 = vmatprep.subr.mxu0 %v595
      %829 = vmatpush1.msra.mxu0 %v593
      %830 = vmatprep.subr.mxu0 0.0
      %831 = vmatpush1.msra.mxu0 0.0
      %832 = vmatprep.subr.mxu0 0.0
      %833 = vmatpush1.msra.mxu0 0.0
      %834 = vmatprep.subr.mxu0 0.0
      %835 = vmatpush1.msra.mxu0 0.0
      %836 = vmatprep.subr.mxu0 0.0
      %837 = vmatpush1.msra.mxu0 0.0
      %838 = vmatprep.subr.mxu0 0.0
      %839 = vmatpush1.msra.mxu0 0.0
      %840 = vmatprep.subr.mxu0 0.0
      %841 = vmatpush1.msra.mxu0 0.0
      %842 = vmatprep.subr.mxu0 0.0
      %843 = vmatpush1.msra.mxu0 0.0
      %844 = vmatprep.subr.mxu0 0.0
      %845 = vmatpush1.msra.mxu0 0.0
      %846 = vmatprep.subr.mxu0 0.0
      %847 = vmatpush1.msra.mxu0 0.0
      %848 = vmatprep.subr.mxu0 0.0
      %849 = vmatpush1.msra.mxu0 0.0
      %850 = vmatprep.subr.mxu0 0.0
      %851 = vmatpush1.msra.mxu0 0.0
      %852 = vmatprep.subr.mxu0 0.0
      %853 = vmatpush1.msra.mxu0 0.0
      %854 = vmatprep.subr.mxu0 0.0
      %855 = vmatpush1.msra.mxu0 0.0
      %856 = vmatprep.subr.mxu0 0.0
      %857 = vmatpush1.msra.mxu0 0.0
      %858 = vmatprep.subr.mxu0 0.0
      %859 = vmatpush1.msra.mxu0 0.0
      %860 = vmatprep.subr.mxu0 0.0
      %861 = vmatpush1.msra.mxu0 0.0
      %862 = vmatprep.subr.mxu0 0.0
      %863 = vmatpush1.msra.mxu0 0.0
      %864 = vmatprep.subr.mxu0 0.0
      %865 = vmatpush1.msra.mxu0 0.0
      %866 = vmatprep.subr.mxu0 0.0
      %867 = vmatpush1.msra.mxu0 0.0
      %868 = vmatprep.subr.mxu0 0.0
      %869 = vmatpush1.msra.mxu0 0.0
      %870 = vmatprep.subr.mxu0 0.0
      %871 = vmatpush1.msra.mxu0 0.0
      %872 = vmatprep.subr.mxu0 0.0
      %873 = vmatpush1.msra.mxu0 0.0
      %874 = vmatprep.subr.mxu0 0.0
      %875 = vmatpush1.msra.mxu0 0.0
      %876 = vmatprep.subr.mxu0 0.0
      %877 = vmatpush1.msra.mxu0 0.0
      %878 = vmatprep.subr.mxu0 0.0
      %879 = vmatpush1.msra.mxu0 0.0
      %880 = vmatprep.subr.mxu0 0.0
      %881 = vmatpush1.msra.mxu0 0.0
      %882 = vmatprep.subr.mxu0 0.0
      %883 = vmatpush1.msra.mxu0 0.0
      %884 = vmatprep.subr.mxu0 0.0
      %885 = vmatpush1.msra.mxu0 0.0
      %886 = vmatprep.mubr.f32.mxu0 0.0
      %887 = vmatmul.mubr.f32.gmra.mrb[0].mxu0 %v820
      %v888 = vpop.f32.mrb[0].mxu0
      %v889 = vadd.f32 %v815, %v888
      %v890 = vpop.f32.mrb[0].mxu0
      %v891 = vadd.f32 %v817, %v890
      %892 = vdwg.mxu0
      %v893 = vld [vmem:[%s455] sm:$0x1]
      %895 = vset.pattern.permute.xlu0 0
      %896 = vperm.xlu0 %895, %v893
      %v897 = vpop.permute.xlu0 %896
      %v899 = vlaneseq
      %v900 = vshrl.u32 %v899, 7
      %v901 = vsub.s32 0, %v900
      %v902 = vrot.slane %v897, %v901
      %v903 = vadd.f32 %v889, %v902
      %v904 = vadd.f32 %v891, %v902
      %v907 = vcombine.low %v903, %v904
      %v909 = vunpack.c.l.s4 1966171168
      %v910 = vunpack.c.0.s8 %v909
      %v911 = vlaneseq
      %v912 = vshrl.u32 %v911, 7
      %v913 = vsub.s32 %v910, %v912
      %v914 = vrot.slane %v907, %v913
      %v916 = vunpack.c.l.s4 1966171168
      %v917 = vunpack.c.0.s8 %v916
      %v918 = vlaneseq
      %v919 = vshrl.u32 %v918, 7
      %v920 = vsub.s32 %v917, %v919
      %v921 = vrot.slane %v914, %v920
      %v923 = vlaneseq
      %vm924 = vcmp.ge.s32.totalorder %v923, 0
      %vm925 = vcmp.lt.s32.totalorder %v923, 256
      %vm926 = vmand %vm924, %vm925
      %927 = vst.msk [vmem:[%s463] sm:$0x3] %vm926, %v921
      %s928 = smul.u32 2, %s24
      %p929 = scmp.lt.s32.totalorder %s23, 1
      %s930 = scalar_select %p929, %s23, 1
      %p931 = scmp.lt.s32.totalorder %s928, 1
      %s932 = scalar_select %p931, %s928, 1
      %s933 = smul.addr %s930, 2
      %s934 = sadd.s32 %s932, %s933
      %s935 = scalar_lea.vmem %s8, %s934
      // Predicated region
      $region53: #{occnet_decoder.1} parent=51 // pred_check
        %p936 = pneg %p261
      $region54: #{occnet_decoder.1} parent=51 // pred_check_branch
        %938 = sbr.rel (%p936) target = $region56
      $region55: #{occnet_decoder.1} parent=51 // pred_region
        %s939 = smul.u32 2, %s24
      $region56: #{occnet_decoder.1} parent=51 // pred_fallthru
        _
    $region52: #{occnet_decoder.1} parent=5 // pred_fallthru
      _
    %p940 = scmp.le.s32.totalorder 2, %s14
    // Predicated region
    $region57: #{occnet_decoder.1} parent=5 // pred_check
      %p941 = pneg %p940
    $region58: #{occnet_decoder.1} parent=5 // pred_check_branch
      %943 = sbr.rel (%p941) target = $region60
    $region59: #{occnet_decoder.1} parent=5 // pred_region
      %s944 = ssub.s32 %s14, 2
      // Predicated region
      $region61: #{occnet_decoder.1} parent=59 // pred_check
        %p945 = pneg %p267
      $region62: #{occnet_decoder.1} parent=59 // pred_check_branch
        %947 = sbr.rel (%p945) target = $region64
      $region63: #{occnet_decoder.1} parent=59 // pred_region
        %s948 = smul.u32 2, %s26
        %p949 = scmp.lt.s32.totalorder %s25, 1
        %s950 = scalar_select %p949, %s25, 1
        %p951 = scmp.lt.s32.totalorder %s948, 1
        %s952 = scalar_select %p951, %s948, 1
        %s953 = smul.addr %s950, 2
        %s954 = sadd.s32 %s952, %s953
        %s955 = scalar_lea.vmem %s8, %s954
      $region64: #{occnet_decoder.1} parent=59 // pred_fallthru
        _
    $region60: #{occnet_decoder.1} parent=5 // pred_fallthru
      _
  $region6: #{occnet_decoder.1} parent=0 // loop_footer
    %s18 = sadd.s32 1, %s14
  $region7: #{occnet_decoder.1} parent=0 // loop_footer_branch
    %13 = sbr.rel target = $region3
  $region8: #{occnet_decoder.1} parent=0 // loop_exit
    _

</llo_original>
